<compile_context>
chip_gen: v5e
topology: v5e:2x2
jax: 0.10.0
libtpu: 0.0.40
codegen_flags: <defaults>
</compile_context>

<pallas_src>
import jax
import jax.numpy as jnp
from jax.experimental import pallas as pl
from jax.experimental.pallas import tpu as pltpu


def _round_up(x, m):
    return (x + m - 1) // m * m


def _cdiv(a, b):
    return -(-a // b)


def _num_tensorcores():
    """Megacore (v7x) detection: only used to decide how many batch tiles to cut."""
    try:
        kind = jax.devices()[0].device_kind.lower()
        if "v7" in kind:
            return 2
    except Exception:
        pass
    return 1


def _choose_tiling(batch, num_cores):
    """Batch tiling.

    - Large tiles (up to 512 rows) amortize the ~0.35us per-grid-step overhead
      and the per-layer MXU weight loads.
    - 16-row alignment so bf16 activations fill packed (16,128) vregs.
    - On a 2-TC part (v7x) cut at least `num_cores` tiles so the parallel batch
      axis actually feeds both TensorCores.
    """
    if batch <= 16 or (num_cores <= 1 and batch <= 512):
        tb = _round_up(max(batch, 16), 16)
        return tb, tb
    target_tiles = max(num_cores, _cdiv(batch, 512))
    tb = min(512, _round_up(_cdiv(batch, target_tiles), 16))
    b_pad = _round_up(batch, tb)
    return tb, b_pad


def _make_kernel(n_layers):
    """Kernel refs layout: (x, w0, b0, w1, b1, ..., w{L-1}, b{L-1}, out)."""

    def kernel(*refs):
        x_ref = refs[0]
        out_ref = refs[-1]
        h = x_ref[...]                                   # bf16 (TB, K0_pad)
        for l in range(n_layers):
            w_ref = refs[1 + 2 * l]                      # bf16 (K_pad, N_pad)
            b_ref = refs[2 + 2 * l]                      # f32  (1, N_pad)
            y = jnp.dot(h, w_ref[...],
                        preferred_element_type=jnp.float32) + b_ref[...]
            if l < n_layers - 1:
                # Bias + ReLU epilogue in f32; cast back to bf16 only for the
                # next MXU operand (v5e has no bf16 VPU path).
                h = jnp.maximum(y, 0.0).astype(jnp.bfloat16)
            else:
                out_ref[...] = y.astype(out_ref.dtype)

    return kernel


def pack_params(params, lane=128):
    """One-time prep (do NOT call per forward):
    fold sigmoid(gumbel_pi) gates into the weights and pad every feature dim
    to its own multiple of `lane` (no common square width).

    Returns per-layer weight/bias lists plus the real in/out dims and the
    padded dim chain.
    """
    folded = [(w * jax.nn.sigmoid(g), b) for (w, g, b) in params[:-1]]
    folded.append(params[-1])  # output linear: (wo, bo), no gate

    in_dim = folded[0][0].shape[0]
    out_dim = folded[-1][0].shape[1]
    dims = [in_dim] + [w.shape[1] for w, _ in folded]
    dims_p = [_round_up(d, lane) for d in dims]

    ws, bs = [], []
    for i, (w, b) in enumerate(folded):
        kp, np_ = dims_p[i], dims_p[i + 1]
        di, do = w.shape
        wp = jnp.zeros((kp, np_), jnp.bfloat16).at[:di, :do].set(
            w.astype(jnp.bfloat16))
        bp = jnp.zeros((1, np_), jnp.float32).at[0, :do].set(
            jnp.reshape(b, (-1,)).astype(jnp.float32))
        ws.append(wp)
        bs.append(bp)
    return ws, bs, in_dim, out_dim, dims_p


def mlp_plus_forward(x, ws, bs, in_dim, out_dim, dims_p, out_dtype=jnp.float32):
    batch = x.shape[0]
    n_layers = len(ws)
    k0 = dims_p[0]
    n_last = dims_p[-1]

    num_cores = _num_tensorcores()
    TB, B_pad = _choose_tiling(batch, num_cores)
    n_tiles = B_pad // TB

    # Cast + pad in one fused jnp.pad (feature dim to lane width, batch to tile
    # multiple). TODO(synk): for very large batches fuse this pad/cast into the
    # upstream producer to avoid an extra HBM round-trip of the activations.
    x_p = jnp.pad(x.astype(jnp.bfloat16),
                  ((0, B_pad - batch), (0, k0 - in_dim)))

    out_itemsize = jnp.dtype(out_dtype).itemsize
    w_bytes = sum(int(w.size) * 2 for w in ws)
    b_bytes = sum(int(b.size) * 4 for b in bs)
    flops = sum(2 * B_pad * w.shape[0] * w.shape[1] for w in ws)
    cost = pl.CostEstimate(
        flops=int(flops),
        transcendentals=0,
        bytes_accessed=int(x_p.size * 2 + w_bytes + b_bytes
                           + B_pad * n_last * out_itemsize),
    )

    def _run(single_buffer_resident):
        # Grid-invariant weight/bias blocks: single-buffer them (saves VMEM,
        # matters on v7x's 32 MiB scoped / 64 MiB physical VMEM).
        def resident_spec(shape):
            if single_buffer_resident:
                return pl.BlockSpec(shape, lambda i: (0, 0),
                                    pipeline_mode=pl.Buffered(1))
            return pl.BlockSpec(shape, lambda i: (0, 0))

        operands = [x_p]
        in_specs = [pl.BlockSpec((TB, k0), lambda i: (i, 0))]
        for wl, bl in zip(ws, bs):
            operands += [wl, bl]
            in_specs += [resident_spec(wl.shape), resident_spec(bl.shape)]

        resident_buf = 1 if single_buffer_resident else 2
        vmem_need = (w_bytes * resident_buf + b_bytes * resident_buf
                     + 2 * TB * k0 * 2              # double-buffered x tiles
                     + 2 * TB * n_last * out_itemsize)  # double-buffered out tiles
        vmem_limit = min(128 << 20, max(16 << 20, int(vmem_need * 1.25) + (2 << 20)))

        return pl.pallas_call(
            _make_kernel(n_layers),
            out_shape=jax.ShapeDtypeStruct((B_pad, n_last), out_dtype),
            grid=(n_tiles,),
            in_specs=in_specs,
            out_specs=pl.BlockSpec((TB, n_last), lambda i: (i, 0)),
            compiler_params=pltpu.CompilerParams(
                dimension_semantics=("parallel",),
                vmem_limit_bytes=vmem_limit),
            cost_estimate=cost,
        )(*operands)

    try:
        out = _run(True)
    except Exception:
        # TODO(synk): pipeline_mode=pl.Buffered(1) unsupported on this jax
        # version; fall back to default double-buffering of the resident slabs.
        out = _run(False)

    # Slice the lane-dense padded slab back to the real logits.
    return out[:batch, :out_dim]


def init_params(key, input_dim, hidden_dims, output_dim, init_mask=0.0):
    """Deterministic synthetic parameters matching MLP_plus.__init__ shapes.
    Weights stored as (in_features, out_features) so y = x @ W + b."""
    params = []
    past = input_dim
    for h in hidden_dims:
        key, kw, kb = jax.random.split(key, 3)
        bound = 1.0 / jnp.sqrt(past)
        w = jax.random.uniform(kw, (past, h), jnp.float32, -bound, bound)
        b = jax.random.uniform(kb, (1, h), jnp.float32, -bound, bound)
        g = jnp.full((past, h), init_mask, jnp.float32)  # gumbel_pi init
        params.append((w, g, b))
        past = h
    key, kw, kb = jax.random.split(key, 3)
    bound = 1.0 / jnp.sqrt(past)
    wo = jax.random.uniform(kw, (past, output_dim), jnp.float32, -bound, bound)
    bo = jax.random.uniform(kb, (1, output_dim), jnp.float32, -bound, bound)
    params.append((wo, bo))
    return params


def reference_forward(x, params):
    """Pure-f32 reference of the same forward (soft gate, no pruning)."""
    h = x
    for w, g, b in params[:-1]:
        h = jnp.maximum(h @ (w * jax.nn.sigmoid(g)) + b, 0.0)
    wo, bo = params[-1]
    return h @ wo + bo


if __name__ == "__main__":
    key = jax.random.PRNGKey(0)
    k_x, k_p, k_x2 = jax.random.split(key, 3)

    batch = 8
    input_dim = 16
    hidden_dims = [32, 32, 32]   # small stand-in for default [100, 100, 32]
    output_dim = 2

    x = jax.random.normal(k_x, (batch, input_dim), jnp.float32)
    params = init_params(k_p, input_dim, hidden_dims, output_dim, init_mask=0.0)

    # One-time prep (gate folding + per-layer padding), then the hot kernel.
    ws, bs, in_dim, out_dim, dims_p = pack_params(params)

    logits = mlp_plus_forward(x, ws, bs, in_dim, out_dim, dims_p)
    jax.block_until_ready(logits)
    ref = reference_forward(x, params)
    assert logits.shape == (batch, output_dim)
    assert bool(jnp.all(jnp.isfinite(logits)))
    # bf16 MXU operands (f32 accumulation) -> tolerance loosened vs pure-f32 ref.
    assert jnp.allclose(logits, ref, atol=5e-2, rtol=5e-2), \
        float(jnp.max(jnp.abs(logits - ref)))

    # Exercise the multi-tile (grid > 1) batch path too.
    batch2 = 600
    x2 = jax.random.normal(k_x2, (batch2, input_dim), jnp.float32)
    logits2 = mlp_plus_forward(x2, ws, bs, in_dim, out_dim, dims_p)
    jax.block_until_ready(logits2)
    ref2 = reference_forward(x2, params)
    assert logits2.shape == (batch2, output_dim)
    assert bool(jnp.all(jnp.isfinite(logits2)))
    assert jnp.allclose(logits2, ref2, atol=5e-2, rtol=5e-2), \
        float(jnp.max(jnp.abs(logits2 - ref2)))

    print("KERNEL_OK")
</pallas_src>

<mosaic_0001>
module attributes {stable_mosaic.version = 11 : i64} {
  func.func @kernel(%arg0: i32, %arg1: memref<16x128xbf16, #tpu.memory_space<vmem>>, %arg2: memref<128x128xbf16, #tpu.memory_space<vmem>>, %arg3: memref<1x128xf32, #tpu.memory_space<vmem>>, %arg4: memref<128x128xbf16, #tpu.memory_space<vmem>>, %arg5: memref<1x128xf32, #tpu.memory_space<vmem>>, %arg6: memref<128x128xbf16, #tpu.memory_space<vmem>>, %arg7: memref<1x128xf32, #tpu.memory_space<vmem>>, %arg8: memref<128x128xbf16, #tpu.memory_space<vmem>>, %arg9: memref<1x128xf32, #tpu.memory_space<vmem>>, %arg10: memref<16x128xf32, #tpu.memory_space<vmem>>) attributes {dimension_semantics = [#tpu.dimension_semantics<parallel>], iteration_bounds = array<i64: 1>, scalar_prefetch = 0 : i64, scratch_operands = 0 : i64, tpu.core_type = #tpu.core_type<tc>, window_params = [{transform_indices = @transform_0, window_bounds = array<i64: 16, 128>}, {pipeline_mode = #tpu.pipeline_mode<synchronous>, transform_indices = @transform_1, window_bounds = array<i64: 128, 128>}, {pipeline_mode = #tpu.pipeline_mode<synchronous>, transform_indices = @transform_2, window_bounds = array<i64: 1, 128>}, {pipeline_mode = #tpu.pipeline_mode<synchronous>, transform_indices = @transform_3, window_bounds = array<i64: 128, 128>}, {pipeline_mode = #tpu.pipeline_mode<synchronous>, transform_indices = @transform_4, window_bounds = array<i64: 1, 128>}, {pipeline_mode = #tpu.pipeline_mode<synchronous>, transform_indices = @transform_5, window_bounds = array<i64: 128, 128>}, {pipeline_mode = #tpu.pipeline_mode<synchronous>, transform_indices = @transform_6, window_bounds = array<i64: 1, 128>}, {pipeline_mode = #tpu.pipeline_mode<synchronous>, transform_indices = @transform_7, window_bounds = array<i64: 128, 128>}, {pipeline_mode = #tpu.pipeline_mode<synchronous>, transform_indices = @transform_8, window_bounds = array<i64: 1, 128>}, {transform_indices = @transform_9, window_bounds = array<i64: 16, 128>}]} {
    %c0 = arith.constant 0 : index
    %c0_0 = arith.constant 0 : index
    %0 = vector.load %arg1[%c0, %c0_0] : memref<16x128xbf16, #tpu.memory_space<vmem>>, vector<16x128xbf16>
    %c0_1 = arith.constant 0 : index
    %c0_2 = arith.constant 0 : index
    %1 = vector.load %arg2[%c0_1, %c0_2] : memref<128x128xbf16, #tpu.memory_space<vmem>>, vector<128x128xbf16>
    %cst = arith.constant dense<0.000000e+00> : vector<16x128xf32>
    %2 = tpu.matmul %0, %1, %cst {dimension_numbers = #tpu.dot_dimension_numbers<[1], [0], [0], [1], [0, 0, 1, 1], [], []>} : vector<16x128xbf16>, vector<128x128xbf16>, vector<16x128xf32> -> vector<16x128xf32>
    %c0_3 = arith.constant 0 : index
    %c0_4 = arith.constant 0 : index
    %3 = vector.load %arg3[%c0_3, %c0_4] : memref<1x128xf32, #tpu.memory_space<vmem>>, vector<1x128xf32>
    %4 = vector.broadcast %3 : vector<1x128xf32> to vector<16x128xf32>
    %5 = arith.addf %2, %4 : vector<16x128xf32>
    %cst_5 = arith.constant 0.000000e+00 : f32
    %6 = vector.broadcast %cst_5 : f32 to vector<16x128xf32>
    %7 = arith.maximumf %5, %6 : vector<16x128xf32>
    %8 = arith.truncf %7 : vector<16x128xf32> to vector<16x128xbf16>
    %c0_6 = arith.constant 0 : index
    %c0_7 = arith.constant 0 : index
    %9 = vector.load %arg4[%c0_6, %c0_7] : memref<128x128xbf16, #tpu.memory_space<vmem>>, vector<128x128xbf16>
    %cst_8 = arith.constant dense<0.000000e+00> : vector<16x128xf32>
    %10 = tpu.matmul %8, %9, %cst_8 {dimension_numbers = #tpu.dot_dimension_numbers<[1], [0], [0], [1], [0, 0, 1, 1], [], []>} : vector<16x128xbf16>, vector<128x128xbf16>, vector<16x128xf32> -> vector<16x128xf32>
    %c0_9 = arith.constant 0 : index
    %c0_10 = arith.constant 0 : index
    %11 = vector.load %arg5[%c0_9, %c0_10] : memref<1x128xf32, #tpu.memory_space<vmem>>, vector<1x128xf32>
    %12 = vector.broadcast %11 : vector<1x128xf32> to vector<16x128xf32>
    %13 = arith.addf %10, %12 : vector<16x128xf32>
    %cst_11 = arith.constant 0.000000e+00 : f32
    %14 = vector.broadcast %cst_11 : f32 to vector<16x128xf32>
    %15 = arith.maximumf %13, %14 : vector<16x128xf32>
    %16 = arith.truncf %15 : vector<16x128xf32> to vector<16x128xbf16>
    %c0_12 = arith.constant 0 : index
    %c0_13 = arith.constant 0 : index
    %17 = vector.load %arg6[%c0_12, %c0_13] : memref<128x128xbf16, #tpu.memory_space<vmem>>, vector<128x128xbf16>
    %cst_14 = arith.constant dense<0.000000e+00> : vector<16x128xf32>
    %18 = tpu.matmul %16, %17, %cst_14 {dimension_numbers = #tpu.dot_dimension_numbers<[1], [0], [0], [1], [0, 0, 1, 1], [], []>} : vector<16x128xbf16>, vector<128x128xbf16>, vector<16x128xf32> -> vector<16x128xf32>
    %c0_15 = arith.constant 0 : index
    %c0_16 = arith.constant 0 : index
    %19 = vector.load %arg7[%c0_15, %c0_16] : memref<1x128xf32, #tpu.memory_space<vmem>>, vector<1x128xf32>
    %20 = vector.broadcast %19 : vector<1x128xf32> to vector<16x128xf32>
    %21 = arith.addf %18, %20 : vector<16x128xf32>
    %cst_17 = arith.constant 0.000000e+00 : f32
    %22 = vector.broadcast %cst_17 : f32 to vector<16x128xf32>
    %23 = arith.maximumf %21, %22 : vector<16x128xf32>
    %24 = arith.truncf %23 : vector<16x128xf32> to vector<16x128xbf16>
    %c0_18 = arith.constant 0 : index
    %c0_19 = arith.constant 0 : index
    %25 = vector.load %arg8[%c0_18, %c0_19] : memref<128x128xbf16, #tpu.memory_space<vmem>>, vector<128x128xbf16>
    %cst_20 = arith.constant dense<0.000000e+00> : vector<16x128xf32>
    %26 = tpu.matmul %24, %25, %cst_20 {dimension_numbers = #tpu.dot_dimension_numbers<[1], [0], [0], [1], [0, 0, 1, 1], [], []>} : vector<16x128xbf16>, vector<128x128xbf16>, vector<16x128xf32> -> vector<16x128xf32>
    %c0_21 = arith.constant 0 : index
    %c0_22 = arith.constant 0 : index
    %27 = vector.load %arg9[%c0_21, %c0_22] : memref<1x128xf32, #tpu.memory_space<vmem>>, vector<1x128xf32>
    %28 = vector.broadcast %27 : vector<1x128xf32> to vector<16x128xf32>
    %29 = arith.addf %26, %28 : vector<16x128xf32>
    %c0_23 = arith.constant 0 : index
    %c0_24 = arith.constant 0 : index
    %30 = vector.load %arg10[%c0_23, %c0_24] : memref<16x128xf32, #tpu.memory_space<vmem>>, vector<16x128xf32>
    tpu.vector_store %arg10[%c0_23, %c0_24], %29 {strides = array<i32>} : memref<16x128xf32, #tpu.memory_space<vmem>>, vector<16x128xf32>,
    return
  }
  func.func @transform_0(%arg0: i32) -> (i32, i32) {
    %c0_i32 = arith.constant 0 : i32
    %c0_i32_0 = arith.constant 0 : i32
    return %arg0, %c0_i32 : i32, i32
  }
  func.func @transform_1(%arg0: i32) -> (i32, i32) {
    %c0_i32 = arith.constant 0 : i32
    %c0_i32_0 = arith.constant 0 : i32
    %c0_i32_1 = arith.constant 0 : i32
    return %c0_i32, %c0_i32_0 : i32, i32
  }
  func.func @transform_2(%arg0: i32) -> (i32, i32) {
    %c0_i32 = arith.constant 0 : i32
    %c0_i32_0 = arith.constant 0 : i32
    %c0_i32_1 = arith.constant 0 : i32
    return %c0_i32, %c0_i32_0 : i32, i32
  }
  func.func @transform_3(%arg0: i32) -> (i32, i32) {
    %c0_i32 = arith.constant 0 : i32
    %c0_i32_0 = arith.constant 0 : i32
    %c0_i32_1 = arith.constant 0 : i32
    return %c0_i32, %c0_i32_0 : i32, i32
  }
  func.func @transform_4(%arg0: i32) -> (i32, i32) {
    %c0_i32 = arith.constant 0 : i32
    %c0_i32_0 = arith.constant 0 : i32
    %c0_i32_1 = arith.constant 0 : i32
    return %c0_i32, %c0_i32_0 : i32, i32
  }
  func.func @transform_5(%arg0: i32) -> (i32, i32) {
    %c0_i32 = arith.constant 0 : i32
    %c0_i32_0 = arith.constant 0 : i32
    %c0_i32_1 = arith.constant 0 : i32
    return %c0_i32, %c0_i32_0 : i32, i32
  }
  func.func @transform_6(%arg0: i32) -> (i32, i32) {
    %c0_i32 = arith.constant 0 : i32
    %c0_i32_0 = arith.constant 0 : i32
    %c0_i32_1 = arith.constant 0 : i32
    return %c0_i32, %c0_i32_0 : i32, i32
  }
  func.func @transform_7(%arg0: i32) -> (i32, i32) {
    %c0_i32 = arith.constant 0 : i32
    %c0_i32_0 = arith.constant 0 : i32
    %c0_i32_1 = arith.constant 0 : i32
    return %c0_i32, %c0_i32_0 : i32, i32
  }
  func.func @transform_8(%arg0: i32) -> (i32, i32) {
    %c0_i32 = arith.constant 0 : i32
    %c0_i32_0 = arith.constant 0 : i32
    %c0_i32_1 = arith.constant 0 : i32
    return %c0_i32, %c0_i32_0 : i32, i32
  }
  func.func @transform_9(%arg0: i32) -> (i32, i32) {
    %c0_i32 = arith.constant 0 : i32
    %c0_i32_0 = arith.constant 0 : i32
    return %arg0, %c0_i32 : i32, i32
  }
}

module attributes {stable_mosaic.version = 11 : i64} {
  func.func @kernel(%arg0: i32, %arg1: memref<16x128xbf16, #tpu.memory_space<vmem>>, %arg2: memref<128x128xbf16, #tpu.memory_space<vmem>>, %arg3: memref<1x128xf32, #tpu.memory_space<vmem>>, %arg4: memref<128x128xbf16, #tpu.memory_space<vmem>>, %arg5: memref<1x128xf32, #tpu.memory_space<vmem>>, %arg6: memref<128x128xbf16, #tpu.memory_space<vmem>>, %arg7: memref<1x128xf32, #tpu.memory_space<vmem>>, %arg8: memref<128x128xbf16, #tpu.memory_space<vmem>>, %arg9: memref<1x128xf32, #tpu.memory_space<vmem>>, %arg10: memref<16x128xf32, #tpu.memory_space<vmem>>) attributes {dimension_semantics = [#tpu.dimension_semantics<parallel>], iteration_bounds = array<i64: 1>, scalar_prefetch = 0 : i64, scratch_operands = 0 : i64, tpu.core_type = #tpu.core_type<tc>, window_params = [{transform_indices = @transform_0, window_bounds = array<i64: 16, 128>}, {pipeline_mode = #tpu.pipeline_mode<synchronous>, transform_indices = @transform_1, window_bounds = array<i64: 128, 128>}, {pipeline_mode = #tpu.pipeline_mode<synchronous>, transform_indices = @transform_2, window_bounds = array<i64: 1, 128>}, {pipeline_mode = #tpu.pipeline_mode<synchronous>, transform_indices = @transform_3, window_bounds = array<i64: 128, 128>}, {pipeline_mode = #tpu.pipeline_mode<synchronous>, transform_indices = @transform_4, window_bounds = array<i64: 1, 128>}, {pipeline_mode = #tpu.pipeline_mode<synchronous>, transform_indices = @transform_5, window_bounds = array<i64: 128, 128>}, {pipeline_mode = #tpu.pipeline_mode<synchronous>, transform_indices = @transform_6, window_bounds = array<i64: 1, 128>}, {pipeline_mode = #tpu.pipeline_mode<synchronous>, transform_indices = @transform_7, window_bounds = array<i64: 128, 128>}, {pipeline_mode = #tpu.pipeline_mode<synchronous>, transform_indices = @transform_8, window_bounds = array<i64: 1, 128>}, {transform_indices = @transform_9, window_bounds = array<i64: 16, 128>}]} {
    %c0 = arith.constant 0 : index
    %c0_0 = arith.constant 0 : index
    %0 = vector.load %arg1[%c0, %c0_0] : memref<16x128xbf16, #tpu.memory_space<vmem>>, vector<16x128xbf16>
    %c0_1 = arith.constant 0 : index
    %c0_2 = arith.constant 0 : index
    %1 = vector.load %arg2[%c0_1, %c0_2] : memref<128x128xbf16, #tpu.memory_space<vmem>>, vector<128x128xbf16>
    %cst = arith.constant dense<0.000000e+00> : vector<16x128xf32>
    %2 = tpu.matmul %0, %1, %cst {dimension_numbers = #tpu.dot_dimension_numbers<[1], [0], [0], [1], [0, 0, 1, 1], [], []>} : vector<16x128xbf16>, vector<128x128xbf16>, vector<16x128xf32> -> vector<16x128xf32>
    %c0_3 = arith.constant 0 : index
    %c0_4 = arith.constant 0 : index
    %3 = vector.load %arg3[%c0_3, %c0_4] : memref<1x128xf32, #tpu.memory_space<vmem>>, vector<1x128xf32>
    %4 = vector.broadcast %3 : vector<1x128xf32> to vector<16x128xf32>
    %5 = arith.addf %2, %4 : vector<16x128xf32>
    %cst_5 = arith.constant 0.000000e+00 : f32
    %6 = vector.broadcast %cst_5 : f32 to vector<16x128xf32>
    %7 = arith.maximumf %5, %6 : vector<16x128xf32>
    %8 = arith.truncf %7 : vector<16x128xf32> to vector<16x128xbf16>
    %c0_6 = arith.constant 0 : index
    %c0_7 = arith.constant 0 : index
    %9 = vector.load %arg4[%c0_6, %c0_7] : memref<128x128xbf16, #tpu.memory_space<vmem>>, vector<128x128xbf16>
    %cst_8 = arith.constant dense<0.000000e+00> : vector<16x128xf32>
    %10 = tpu.matmul %8, %9, %cst_8 {dimension_numbers = #tpu.dot_dimension_numbers<[1], [0], [0], [1], [0, 0, 1, 1], [], []>} : vector<16x128xbf16>, vector<128x128xbf16>, vector<16x128xf32> -> vector<16x128xf32>
    %c0_9 = arith.constant 0 : index
    %c0_10 = arith.constant 0 : index
    %11 = vector.load %arg5[%c0_9, %c0_10] : memref<1x128xf32, #tpu.memory_space<vmem>>, vector<1x128xf32>
    %12 = vector.broadcast %11 : vector<1x128xf32> to vector<16x128xf32>
    %13 = arith.addf %10, %12 : vector<16x128xf32>
    %cst_11 = arith.constant 0.000000e+00 : f32
    %14 = vector.broadcast %cst_11 : f32 to vector<16x128xf32>
    %15 = arith.maximumf %13, %14 : vector<16x128xf32>
    %16 = arith.truncf %15 : vector<16x128xf32> to vector<16x128xbf16>
    %c0_12 = arith.constant 0 : index
    %c0_13 = arith.constant 0 : index
    %17 = vector.load %arg6[%c0_12, %c0_13] : memref<128x128xbf16, #tpu.memory_space<vmem>>, vector<128x128xbf16>
    %cst_14 = arith.constant dense<0.000000e+00> : vector<16x128xf32>
    %18 = tpu.matmul %16, %17, %cst_14 {dimension_numbers = #tpu.dot_dimension_numbers<[1], [0], [0], [1], [0, 0, 1, 1], [], []>} : vector<16x128xbf16>, vector<128x128xbf16>, vector<16x128xf32> -> vector<16x128xf32>
    %c0_15 = arith.constant 0 : index
    %c0_16 = arith.constant 0 : index
    %19 = vector.load %arg7[%c0_15, %c0_16] : memref<1x128xf32, #tpu.memory_space<vmem>>, vector<1x128xf32>
    %20 = vector.broadcast %19 : vector<1x128xf32> to vector<16x128xf32>
    %21 = arith.addf %18, %20 : vector<16x128xf32>
    %cst_17 = arith.constant 0.000000e+00 : f32
    %22 = vector.broadcast %cst_17 : f32 to vector<16x128xf32>
    %23 = arith.maximumf %21, %22 : vector<16x128xf32>
    %24 = arith.truncf %23 : vector<16x128xf32> to vector<16x128xbf16>
    %c0_18 = arith.constant 0 : index
    %c0_19 = arith.constant 0 : index
    %25 = vector.load %arg8[%c0_18, %c0_19] : memref<128x128xbf16, #tpu.memory_space<vmem>>, vector<128x128xbf16>
    %cst_20 = arith.constant dense<0.000000e+00> : vector<16x128xf32>
    %26 = tpu.matmul %24, %25, %cst_20 {dimension_numbers = #tpu.dot_dimension_numbers<[1], [0], [0], [1], [0, 0, 1, 1], [], []>} : vector<16x128xbf16>, vector<128x128xbf16>, vector<16x128xf32> -> vector<16x128xf32>
    %c0_21 = arith.constant 0 : index
    %c0_22 = arith.constant 0 : index
    %27 = vector.load %arg9[%c0_21, %c0_22] : memref<1x128xf32, #tpu.memory_space<vmem>>, vector<1x128xf32>
    %28 = vector.broadcast %27 : vector<1x128xf32> to vector<16x128xf32>
    %29 = arith.addf %26, %28 : vector<16x128xf32>
    %c0_23 = arith.constant 0 : index
    %c0_24 = arith.constant 0 : index
    %30 = vector.load %arg10[%c0_23, %c0_24] : memref<16x128xf32, #tpu.memory_space<vmem>>, vector<16x128xf32>
    tpu.vector_store %arg10[%c0_23, %c0_24], %29 {strides = array<i32>} : memref<16x128xf32, #tpu.memory_space<vmem>>, vector<16x128xf32>,
    return
  }
  func.func @transform_0(%arg0: i32) -> (i32, i32) {
    %c0_i32 = arith.constant 0 : i32
    %c0_i32_0 = arith.constant 0 : i32
    return %arg0, %c0_i32 : i32, i32
  }
  func.func @transform_1(%arg0: i32) -> (i32, i32) {
    %c0_i32 = arith.constant 0 : i32
    %c0_i32_0 = arith.constant 0 : i32
    %c0_i32_1 = arith.constant 0 : i32
    return %c0_i32, %c0_i32_0 : i32, i32
  }
  func.func @transform_2(%arg0: i32) -> (i32, i32) {
    %c0_i32 = arith.constant 0 : i32
    %c0_i32_0 = arith.constant 0 : i32
    %c0_i32_1 = arith.constant 0 : i32
    return %c0_i32, %c0_i32_0 : i32, i32
  }
  func.func @transform_3(%arg0: i32) -> (i32, i32) {
    %c0_i32 = arith.constant 0 : i32
    %c0_i32_0 = arith.constant 0 : i32
    %c0_i32_1 = arith.constant 0 : i32
    return %c0_i32, %c0_i32_0 : i32, i32
  }
  func.func @transform_4(%arg0: i32) -> (i32, i32) {
    %c0_i32 = arith.constant 0 : i32
    %c0_i32_0 = arith.constant 0 : i32
    %c0_i32_1 = arith.constant 0 : i32
    return %c0_i32, %c0_i32_0 : i32, i32
  }
  func.func @transform_5(%arg0: i32) -> (i32, i32) {
    %c0_i32 = arith.constant 0 : i32
    %c0_i32_0 = arith.constant 0 : i32
    %c0_i32_1 = arith.constant 0 : i32
    return %c0_i32, %c0_i32_0 : i32, i32
  }
  func.func @transform_6(%arg0: i32) -> (i32, i32) {
    %c0_i32 = arith.constant 0 : i32
    %c0_i32_0 = arith.constant 0 : i32
    %c0_i32_1 = arith.constant 0 : i32
    return %c0_i32, %c0_i32_0 : i32, i32
  }
  func.func @transform_7(%arg0: i32) -> (i32, i32) {
    %c0_i32 = arith.constant 0 : i32
    %c0_i32_0 = arith.constant 0 : i32
    %c0_i32_1 = arith.constant 0 : i32
    return %c0_i32, %c0_i32_0 : i32, i32
  }
  func.func @transform_8(%arg0: i32) -> (i32, i32) {
    %c0_i32 = arith.constant 0 : i32
    %c0_i32_0 = arith.constant 0 : i32
    %c0_i32_1 = arith.constant 0 : i32
    return %c0_i32, %c0_i32_0 : i32, i32
  }
  func.func @transform_9(%arg0: i32) -> (i32, i32) {
    %c0_i32 = arith.constant 0 : i32
    %c0_i32_0 = arith.constant 0 : i32
    return %arg0, %c0_i32 : i32, i32
  }
}

</mosaic_0001>

<llo_original>
// kernel: tpu_custom_call.1
$region0: #{tpu_custom_call.1}
  #allocation0 [shape = 'u32[]', space=smem, size = 0x4, offset = 0x4, fixed_abs, tag = 'smem constant byte address 0x4 - core index']
  #allocation1 [shape = 'u32[72,128]{1,0:T(1,128)}', space=vmem, size = 0x9000, scoped, tag = 'internal scratch']
  %s0 = inlined_call_operand.hbm [shape: bf16[16,128], index: 0, kind: input, shape index: {}]
  %s1 = inlined_call_operand.hbm [shape: bf16[128,128], index: 1, kind: input, shape index: {}]
  %s2 = inlined_call_operand.vmem [shape: f32[1,128], index: 2, kind: input, shape index: {}]
  %s3 = inlined_call_operand.hbm [shape: bf16[128,128], index: 3, kind: input, shape index: {}]
  %s4 = inlined_call_operand.vmem [shape: f32[1,128], index: 4, kind: input, shape index: {}]
  %s5 = inlined_call_operand.hbm [shape: bf16[128,128], index: 5, kind: input, shape index: {}]
  %s6 = inlined_call_operand.vmem [shape: f32[1,128], index: 6, kind: input, shape index: {}]
  %s7 = inlined_call_operand.hbm [shape: bf16[128,128], index: 7, kind: input, shape index: {}]
  %s8 = inlined_call_operand.vmem [shape: f32[1,128], index: 8, kind: input, shape index: {}]
  %s9 = inlined_call_operand.hbm [shape: f32[16,128], index: 9, kind: output, shape index: {}]
  %s10 = sld [smem:[#allocation0]]
  $region66: #{tpu_custom_call.1} parent=0
    _
  %s12 = ssub.s32 1, %s10
  %s13 = scalar_select 0, %s12, %s10
  $region1: #{tpu_custom_call.1} parent=0
    #allocation2 [shape = 'u8[4096]{0}', space=vmem, size = 0x1000, scoped, tag = 'input window, operand 0, single buffered']
    #allocation3 [shape = 's32[1]{0}', space=sflag, size = 0x4, scoped, tag = 'scoped memory for tpu_custom_call.1']
    #allocation4 [shape = 's32[1]{0}', space=sflag, size = 0x4, scoped, tag = 'scoped memory for tpu_custom_call.1']
    #allocation5 [shape = 'u8[32768]{0}', space=vmem, size = 0x8000, scoped, tag = 'input window, operand 1, single buffered']
    #allocation6 [shape = 's32[1]{0}', space=sflag, size = 0x4, scoped, tag = 'scoped memory for tpu_custom_call.1']
    #allocation7 [shape = 'u8[32768]{0}', space=vmem, size = 0x8000, scoped, tag = 'input window, operand 3, single buffered']
    #allocation8 [shape = 'u8[32768]{0}', space=vmem, size = 0x8000, scoped, tag = 'input window, operand 5, single buffered']
    #allocation9 [shape = 's32[1]{0}', space=sflag, size = 0x4, scoped, tag = 'scoped memory for tpu_custom_call.1']
    #allocation10 [shape = 'u8[32768]{0}', space=vmem, size = 0x8000, scoped, tag = 'input window, operand 7, single buffered']
    #allocation11 [shape = 'u8[8192]{0}', space=vmem, size = 0x2000, scoped, tag = 'output window, operand 0, single buffered']
    %14 = vsyncpa [#allocation3], 0
    %15 = vsyncpa [#allocation6], 0
    %16 = vsyncpa [#allocation9], 0
    %17 = vsyncpa [#allocation4], 0
    // Predicated region
    $region2: #{tpu_custom_call.1} parent=1 // pred_check
      _
    $region3: #{tpu_custom_call.1} parent=1 // pred_check_branch
      %19 = sbr.rel (0) target = $region5
    $region4: #{tpu_custom_call.1} parent=1 // pred_region
      %21 = vsyncadd [#allocation3], 0
      %s22 = sshll.u32 %s0, 4
      %s23 = int_to_ptr.hbm [resolvable:$true] %s22
      %s24 = sshll.u32 [#allocation2], 4
      %s25 = int_to_ptr.vmem [resolvable:$true] %s24
      %30 = dma.hbm_to_vmem [thread:$0]  %s23, 128, %s25, [#allocation3], 64, 64, 4
    $region5: #{tpu_custom_call.1} parent=1 // pred_fallthru
      _
    // Predicated region
    $region6: #{tpu_custom_call.1} parent=1 // pred_check
      _
    $region7: #{tpu_custom_call.1} parent=1 // pred_check_branch
      %32 = sbr.rel (0) target = $region9
    $region8: #{tpu_custom_call.1} parent=1 // pred_region
      %34 = vsyncadd [#allocation6], 0
      %s35 = sshll.u32 %s1, 4
      %s36 = int_to_ptr.hbm [resolvable:$true] %s35
      %s37 = sshll.u32 [#allocation5], 4
      %s38 = int_to_ptr.vmem [resolvable:$true] %s37
      %43 = dma.hbm_to_vmem [thread:$0]  %s36, 1024, %s38, [#allocation6], 64, 64, 4
    $region9: #{tpu_custom_call.1} parent=1 // pred_fallthru
      _
    // Predicated region
    $region10: #{tpu_custom_call.1} parent=1 // pred_check
      _
    $region11: #{tpu_custom_call.1} parent=1 // pred_check_branch
      %45 = sbr.rel (0) target = $region13
    $region12: #{tpu_custom_call.1} parent=1 // pred_region
      _
    $region13: #{tpu_custom_call.1} parent=1 // pred_fallthru
      _
    // Predicated region
    $region14: #{tpu_custom_call.1} parent=1 // pred_check
      _
    $region15: #{tpu_custom_call.1} parent=1 // pred_check_branch
      %47 = sbr.rel (0) target = $region17
    $region16: #{tpu_custom_call.1} parent=1 // pred_region
      %49 = vsyncadd [#allocation6], 0
      %s50 = sshll.u32 %s3, 4
      %s51 = int_to_ptr.hbm [resolvable:$true] %s50
      %s52 = sshll.u32 [#allocation7], 4
      %s53 = int_to_ptr.vmem [resolvable:$true] %s52
      %58 = dma.hbm_to_vmem [thread:$0]  %s51, 1024, %s53, [#allocation6], 64, 64, 4
    $region17: #{tpu_custom_call.1} parent=1 // pred_fallthru
      _
    // Predicated region
    $region18: #{tpu_custom_call.1} parent=1 // pred_check
      _
    $region19: #{tpu_custom_call.1} parent=1 // pred_check_branch
      %60 = sbr.rel (0) target = $region21
    $region20: #{tpu_custom_call.1} parent=1 // pred_region
      _
    $region21: #{tpu_custom_call.1} parent=1 // pred_fallthru
      _
    // Predicated region
    $region22: #{tpu_custom_call.1} parent=1 // pred_check
      _
    $region23: #{tpu_custom_call.1} parent=1 // pred_check_branch
      %62 = sbr.rel (0) target = $region25
    $region24: #{tpu_custom_call.1} parent=1 // pred_region
      %64 = vsyncadd [#allocation9], 0
      %s65 = sshll.u32 %s5, 4
      %s66 = int_to_ptr.hbm [resolvable:$true] %s65
      %s67 = sshll.u32 [#allocation8], 4
      %s68 = int_to_ptr.vmem [resolvable:$true] %s67
      %73 = dma.hbm_to_vmem [thread:$0]  %s66, 1024, %s68, [#allocation9], 64, 64, 4
    $region25: #{tpu_custom_call.1} parent=1 // pred_fallthru
      _
    // Predicated region
    $region26: #{tpu_custom_call.1} parent=1 // pred_check
      _
    $region27: #{tpu_custom_call.1} parent=1 // pred_check_branch
      %75 = sbr.rel (0) target = $region29
    $region28: #{tpu_custom_call.1} parent=1 // pred_region
      _
    $region29: #{tpu_custom_call.1} parent=1 // pred_fallthru
      _
    // Predicated region
    $region30: #{tpu_custom_call.1} parent=1 // pred_check
      _
    $region31: #{tpu_custom_call.1} parent=1 // pred_check_branch
      %77 = sbr.rel (0) target = $region33
    $region32: #{tpu_custom_call.1} parent=1 // pred_region
      %79 = vsyncadd [#allocation9], 0
      %s80 = sshll.u32 %s7, 4
      %s81 = int_to_ptr.hbm [resolvable:$true] %s80
      %s82 = sshll.u32 [#allocation10], 4
      %s83 = int_to_ptr.vmem [resolvable:$true] %s82
      %88 = dma.hbm_to_vmem [thread:$0]  %s81, 1024, %s83, [#allocation9], 64, 64, 4
    $region33: #{tpu_custom_call.1} parent=1 // pred_fallthru
      _
    // Predicated region
    $region34: #{tpu_custom_call.1} parent=1 // pred_check
      _
    $region35: #{tpu_custom_call.1} parent=1 // pred_check_branch
      %90 = sbr.rel (0) target = $region37
    $region36: #{tpu_custom_call.1} parent=1 // pred_region
      _
    $region37: #{tpu_custom_call.1} parent=1 // pred_fallthru
      _
    // Predicated region
    $region38: #{tpu_custom_call.1} parent=1 // pred_check
      _
    $region39: #{tpu_custom_call.1} parent=1 // pred_check_branch
      %92 = sbr.rel (0) target = $region41
    $region40: #{tpu_custom_call.1} parent=1 // pred_region
      %94 = dma.done [#allocation3], 128
    $region41: #{tpu_custom_call.1} parent=1 // pred_fallthru
      _
    // Predicated region
    $region42: #{tpu_custom_call.1} parent=1 // pred_check
      _
    $region43: #{tpu_custom_call.1} parent=1 // pred_check_branch
      %96 = sbr.rel (0) target = $region45
    $region44: #{tpu_custom_call.1} parent=1 // pred_region
      %98 = dma.done [#allocation6], 1024
    $region45: #{tpu_custom_call.1} parent=1 // pred_fallthru
      _
    // Predicated region
    $region46: #{tpu_custom_call.1} parent=1 // pred_check
      _
    $region47: #{tpu_custom_call.1} parent=1 // pred_check_branch
      %100 = sbr.rel (0) target = $region49
    $region48: #{tpu_custom_call.1} parent=1 // pred_region
      %102 = dma.done [#allocation6], 1024
    $region49: #{tpu_custom_call.1} parent=1 // pred_fallthru
      _
    // Predicated region
    $region50: #{tpu_custom_call.1} parent=1 // pred_check
      _
    $region51: #{tpu_custom_call.1} parent=1 // pred_check_branch
      %104 = sbr.rel (0) target = $region53
    $region52: #{tpu_custom_call.1} parent=1 // pred_region
      %106 = dma.done [#allocation9], 1024
    $region53: #{tpu_custom_call.1} parent=1 // pred_fallthru
      _
    // Predicated region
    $region54: #{tpu_custom_call.1} parent=1 // pred_check
      _
    $region55: #{tpu_custom_call.1} parent=1 // pred_check_branch
      %108 = sbr.rel (0) target = $region57
    $region56: #{tpu_custom_call.1} parent=1 // pred_region
      %110 = dma.done [#allocation9], 1024
    $region57: #{tpu_custom_call.1} parent=1 // pred_fallthru
      _
    %v111 = vld [vmem:[#allocation2] sm:$0xf]
    %v112 = vld [vmem:[#allocation2 + $0x4] sm:$0xf]
    %v113 = vld [vmem:[#allocation5] sm:$0xf]
    %v114 = vld [vmem:[#allocation5 + $0x4] sm:$0xf]
    %v115 = vld [vmem:[#allocation5 + $0x8] sm:$0xf]
    %v116 = vld [vmem:[#allocation5 + $0xc] sm:$0xf]
    %v117 = vld [vmem:[#allocation5 + $0x10] sm:$0xf]
    %v118 = vld [vmem:[#allocation5 + $0x14] sm:$0xf]
    %v119 = vld [vmem:[#allocation5 + $0x18] sm:$0xf]
    %v120 = vld [vmem:[#allocation5 + $0x1c] sm:$0xf]
    %v121 = vld [vmem:[#allocation5 + $0x20] sm:$0xf]
    %v122 = vld [vmem:[#allocation5 + $0x24] sm:$0xf]
    %v123 = vld [vmem:[#allocation5 + $0x28] sm:$0xf]
    %v124 = vld [vmem:[#allocation5 + $0x2c] sm:$0xf]
    %v125 = vld [vmem:[#allocation5 + $0x30] sm:$0xf]
    %v126 = vld [vmem:[#allocation5 + $0x34] sm:$0xf]
    %v127 = vld [vmem:[#allocation5 + $0x38] sm:$0xf]
    %v128 = vld [vmem:[#allocation5 + $0x3c] sm:$0xf]
    %v129 = vld [vmem:[%s2] sm:$0x1]
    %v131 = vperm.slane %v129, 0
    %v135 = vunpack.c.l.b16 %v111
    %v136 = vunpack.c.l.b16 %v112
    %v137 = vpack.c.b16 %v136, %v135
    %v155 = vunpack.c.l.b16 %v113
    %v156 = vunpack.c.l.b16 %v114
    %v157 = vunpack.c.l.b16 %v115
    %v158 = vunpack.c.l.b16 %v116
    %v159 = vunpack.c.l.b16 %v117
    %v160 = vunpack.c.l.b16 %v118
    %v161 = vunpack.c.l.b16 %v119
    %v162 = vunpack.c.l.b16 %v120
    %v163 = vunpack.c.l.b16 %v121
    %v164 = vunpack.c.l.b16 %v122
    %v165 = vunpack.c.l.b16 %v123
    %v166 = vunpack.c.l.b16 %v124
    %v167 = vunpack.c.l.b16 %v125
    %v168 = vunpack.c.l.b16 %v126
    %v169 = vunpack.c.l.b16 %v127
    %v170 = vunpack.c.l.b16 %v128
    %v171 = vpack.c.b16 %v156, %v155
    %v172 = vpack.c.b16 %v158, %v157
    %v173 = vpack.c.b16 %v160, %v159
    %v174 = vpack.c.b16 %v162, %v161
    %v175 = vpack.c.b16 %v164, %v163
    %v176 = vpack.c.b16 %v166, %v165
    %v177 = vpack.c.b16 %v168, %v167
    %v178 = vpack.c.b16 %v170, %v169
    %187 = vmatpush.bf16.msra.mxu0 %v178
    %188 = vmatpush.bf16.msra.mxu0 %v177
    %189 = vmatpush.bf16.msra.mxu0 %v176
    %190 = vmatpush.bf16.msra.mxu0 %v175
    %191 = vmatpush.bf16.msra.mxu0 %v174
    %192 = vmatpush.bf16.msra.mxu0 %v173
    %193 = vmatpush.bf16.msra.mxu0 %v172
    %194 = vmatpush.bf16.msra.mxu0 %v171
    %195 = vmatmul.bf16.gmra.mxu0 %v137
    %v196 = vpop.f32.mrf.mxu0
    %v197 = vadd.f32 %v131, %v196
    %v198 = vpop.f32.mrf.mxu0
    %v199 = vadd.f32 %v131, %v198
    %200 = vdwg.mxu0
    %v201 = vmax.f32 %v197, 0.0
    %v202 = vmax.f32 %v199, 0.0
    %v203 = vpack.c.bf16 %v202, %v201
    %v204 = vld [vmem:[#allocation7] sm:$0xf]
    %v205 = vld [vmem:[#allocation7 + $0x4] sm:$0xf]
    %v206 = vld [vmem:[#allocation7 + $0x8] sm:$0xf]
    %v207 = vld [vmem:[#allocation7 + $0xc] sm:$0xf]
    %v208 = vld [vmem:[#allocation7 + $0x10] sm:$0xf]
    %v209 = vld [vmem:[#allocation7 + $0x14] sm:$0xf]
    %v210 = vld [vmem:[#allocation7 + $0x18] sm:$0xf]
    %v211 = vld [vmem:[#allocation7 + $0x1c] sm:$0xf]
    %v212 = vld [vmem:[#allocation7 + $0x20] sm:$0xf]
    %v213 = vld [vmem:[#allocation7 + $0x24] sm:$0xf]
    %v214 = vld [vmem:[#allocation7 + $0x28] sm:$0xf]
    %v215 = vld [vmem:[#allocation7 + $0x2c] sm:$0xf]
    %v216 = vld [vmem:[#allocation7 + $0x30] sm:$0xf]
    %v217 = vld [vmem:[#allocation7 + $0x34] sm:$0xf]
    %v218 = vld [vmem:[#allocation7 + $0x38] sm:$0xf]
    %v219 = vld [vmem:[#allocation7 + $0x3c] sm:$0xf]
    %v220 = vld [vmem:[%s4] sm:$0x1]
    %v222 = vperm.slane %v220, 0
    %v240 = vunpack.c.l.b16 %v204
    %v241 = vunpack.c.l.b16 %v205
    %v242 = vunpack.c.l.b16 %v206
    %v243 = vunpack.c.l.b16 %v207
    %v244 = vunpack.c.l.b16 %v208
    %v245 = vunpack.c.l.b16 %v209
    %v246 = vunpack.c.l.b16 %v210
    %v247 = vunpack.c.l.b16 %v211
    %v248 = vunpack.c.l.b16 %v212
    %v249 = vunpack.c.l.b16 %v213
    %v250 = vunpack.c.l.b16 %v214
    %v251 = vunpack.c.l.b16 %v215
    %v252 = vunpack.c.l.b16 %v216
    %v253 = vunpack.c.l.b16 %v217
    %v254 = vunpack.c.l.b16 %v218
    %v255 = vunpack.c.l.b16 %v219
    %v256 = vpack.c.b16 %v241, %v240
    %v257 = vpack.c.b16 %v243, %v242
    %v258 = vpack.c.b16 %v245, %v244
    %v259 = vpack.c.b16 %v247, %v246
    %v260 = vpack.c.b16 %v249, %v248
    %v261 = vpack.c.b16 %v251, %v250
    %v262 = vpack.c.b16 %v253, %v252
    %v263 = vpack.c.b16 %v255, %v254
    %272 = vmatpush.bf16.msra.mxu0 %v263
    %273 = vmatpush.bf16.msra.mxu0 %v262
    %274 = vmatpush.bf16.msra.mxu0 %v261
    %275 = vmatpush.bf16.msra.mxu0 %v260
    %276 = vmatpush.bf16.msra.mxu0 %v259
    %277 = vmatpush.bf16.msra.mxu0 %v258
    %278 = vmatpush.bf16.msra.mxu0 %v257
    %279 = vmatpush.bf16.msra.mxu0 %v256
    %280 = vmatmul.bf16.gmra.mxu0 %v203
    %v281 = vpop.f32.mrf.mxu0
    %v282 = vadd.f32 %v222, %v281
    %v283 = vpop.f32.mrf.mxu0
    %v284 = vadd.f32 %v222, %v283
    %285 = vdwg.mxu0
    %v286 = vmax.f32 %v282, 0.0
    %v287 = vmax.f32 %v284, 0.0
    %v288 = vpack.c.bf16 %v287, %v286
    %v289 = vld [vmem:[#allocation8] sm:$0xf]
    %v290 = vld [vmem:[#allocation8 + $0x4] sm:$0xf]
    %v291 = vld [vmem:[#allocation8 + $0x8] sm:$0xf]
    %v292 = vld [vmem:[#allocation8 + $0xc] sm:$0xf]
    %v293 = vld [vmem:[#allocation8 + $0x10] sm:$0xf]
    %v294 = vld [vmem:[#allocation8 + $0x14] sm:$0xf]
    %v295 = vld [vmem:[#allocation8 + $0x18] sm:$0xf]
    %v296 = vld [vmem:[#allocation8 + $0x1c] sm:$0xf]
    %v297 = vld [vmem:[#allocation8 + $0x20] sm:$0xf]
    %v298 = vld [vmem:[#allocation8 + $0x24] sm:$0xf]
    %v299 = vld [vmem:[#allocation8 + $0x28] sm:$0xf]
    %v300 = vld [vmem:[#allocation8 + $0x2c] sm:$0xf]
    %v301 = vld [vmem:[#allocation8 + $0x30] sm:$0xf]
    %v302 = vld [vmem:[#allocation8 + $0x34] sm:$0xf]
    %v303 = vld [vmem:[#allocation8 + $0x38] sm:$0xf]
    %v304 = vld [vmem:[#allocation8 + $0x3c] sm:$0xf]
    %v305 = vld [vmem:[%s6] sm:$0x1]
    %v307 = vperm.slane %v305, 0
    %v325 = vunpack.c.l.b16 %v289
    %v326 = vunpack.c.l.b16 %v290
    %v327 = vunpack.c.l.b16 %v291
    %v328 = vunpack.c.l.b16 %v292
    %v329 = vunpack.c.l.b16 %v293
    %v330 = vunpack.c.l.b16 %v294
    %v331 = vunpack.c.l.b16 %v295
    %v332 = vunpack.c.l.b16 %v296
    %v333 = vunpack.c.l.b16 %v297
    %v334 = vunpack.c.l.b16 %v298
    %v335 = vunpack.c.l.b16 %v299
    %v336 = vunpack.c.l.b16 %v300
    %v337 = vunpack.c.l.b16 %v301
    %v338 = vunpack.c.l.b16 %v302
    %v339 = vunpack.c.l.b16 %v303
    %v340 = vunpack.c.l.b16 %v304
    %v341 = vpack.c.b16 %v326, %v325
    %v342 = vpack.c.b16 %v328, %v327
    %v343 = vpack.c.b16 %v330, %v329
    %v344 = vpack.c.b16 %v332, %v331
    %v345 = vpack.c.b16 %v334, %v333
    %v346 = vpack.c.b16 %v336, %v335
    %v347 = vpack.c.b16 %v338, %v337
    %v348 = vpack.c.b16 %v340, %v339
    %357 = vmatpush.bf16.msra.mxu0 %v348
    %358 = vmatpush.bf16.msra.mxu0 %v347
    %359 = vmatpush.bf16.msra.mxu0 %v346
    %360 = vmatpush.bf16.msra.mxu0 %v345
    %361 = vmatpush.bf16.msra.mxu0 %v344
    %362 = vmatpush.bf16.msra.mxu0 %v343
    %363 = vmatpush.bf16.msra.mxu0 %v342
    %364 = vmatpush.bf16.msra.mxu0 %v341
    %365 = vmatmul.bf16.gmra.mxu0 %v288
    %v366 = vpop.f32.mrf.mxu0
    %v367 = vadd.f32 %v307, %v366
    %v368 = vpop.f32.mrf.mxu0
    %v369 = vadd.f32 %v307, %v368
    %370 = vdwg.mxu0
    %v371 = vmax.f32 %v367, 0.0
    %v372 = vmax.f32 %v369, 0.0
    %v373 = vpack.c.bf16 %v372, %v371
    %v374 = vld [vmem:[#allocation10] sm:$0xf]
    %v375 = vld [vmem:[#allocation10 + $0x4] sm:$0xf]
    %v376 = vld [vmem:[#allocation10 + $0x8] sm:$0xf]
    %v377 = vld [vmem:[#allocation10 + $0xc] sm:$0xf]
    %v378 = vld [vmem:[#allocation10 + $0x10] sm:$0xf]
    %v379 = vld [vmem:[#allocation10 + $0x14] sm:$0xf]
    %v380 = vld [vmem:[#allocation10 + $0x18] sm:$0xf]
    %v381 = vld [vmem:[#allocation10 + $0x1c] sm:$0xf]
    %v382 = vld [vmem:[#allocation10 + $0x20] sm:$0xf]
    %v383 = vld [vmem:[#allocation10 + $0x24] sm:$0xf]
    %v384 = vld [vmem:[#allocation10 + $0x28] sm:$0xf]
    %v385 = vld [vmem:[#allocation10 + $0x2c] sm:$0xf]
    %v386 = vld [vmem:[#allocation10 + $0x30] sm:$0xf]
    %v387 = vld [vmem:[#allocation10 + $0x34] sm:$0xf]
    %v388 = vld [vmem:[#allocation10 + $0x38] sm:$0xf]
    %v389 = vld [vmem:[#allocation10 + $0x3c] sm:$0xf]
    %v390 = vld [vmem:[%s8] sm:$0x1]
    %v392 = vperm.slane %v390, 0
    %v410 = vunpack.c.l.b16 %v374
    %v411 = vunpack.c.l.b16 %v375
    %v412 = vunpack.c.l.b16 %v376
    %v413 = vunpack.c.l.b16 %v377
    %v414 = vunpack.c.l.b16 %v378
    %v415 = vunpack.c.l.b16 %v379
    %v416 = vunpack.c.l.b16 %v380
    %v417 = vunpack.c.l.b16 %v381
    %v418 = vunpack.c.l.b16 %v382
    %v419 = vunpack.c.l.b16 %v383
    %v420 = vunpack.c.l.b16 %v384
    %v421 = vunpack.c.l.b16 %v385
    %v422 = vunpack.c.l.b16 %v386
    %v423 = vunpack.c.l.b16 %v387
    %v424 = vunpack.c.l.b16 %v388
    %v425 = vunpack.c.l.b16 %v389
    %v426 = vpack.c.b16 %v411, %v410
    %v427 = vpack.c.b16 %v413, %v412
    %v428 = vpack.c.b16 %v415, %v414
    %v429 = vpack.c.b16 %v417, %v416
    %v430 = vpack.c.b16 %v419, %v418
    %v431 = vpack.c.b16 %v421, %v420
    %v432 = vpack.c.b16 %v423, %v422
    %v433 = vpack.c.b16 %v425, %v424
    %442 = vmatpush.bf16.msra.mxu0 %v433
    %443 = vmatpush.bf16.msra.mxu0 %v432
    %444 = vmatpush.bf16.msra.mxu0 %v431
    %445 = vmatpush.bf16.msra.mxu0 %v430
    %446 = vmatpush.bf16.msra.mxu0 %v429
    %447 = vmatpush.bf16.msra.mxu0 %v428
    %448 = vmatpush.bf16.msra.mxu0 %v427
    %449 = vmatpush.bf16.msra.mxu0 %v426
    %450 = vmatmul.bf16.gmra.mxu0 %v373
    %v451 = vpop.f32.mrf.mxu0
    %v452 = vadd.f32 %v392, %v451
    %v453 = vpop.f32.mrf.mxu0
    %v454 = vadd.f32 %v392, %v453
    %455 = vdwg.mxu0
    %456 = vst [vmem:[#allocation11] sm:$0xff] %v452
    %457 = vst [vmem:[#allocation11 + $0x8] sm:$0xff] %v454
    // Predicated region
    $region58: #{tpu_custom_call.1} parent=1 // pred_check
      _
    $region59: #{tpu_custom_call.1} parent=1 // pred_check_branch
      %459 = sbr.rel (0) target = $region61
    $region60: #{tpu_custom_call.1} parent=1 // pred_region
      %461 = vsyncadd [#allocation4], 0
      %s462 = sshll.u32 [#allocation11], 4
      %s463 = int_to_ptr.vmem [resolvable:$true] %s462
      %s464 = sshll.u32 %s9, 4
      %s465 = int_to_ptr.hbm [resolvable:$true] %s464
      %470 = dma.vmem_to_hbm [thread:$0]  %s463, 256, %s465, [#allocation4], 128, 128, 8
    $region61: #{tpu_custom_call.1} parent=1 // pred_fallthru
      _
    // Predicated region
    $region62: #{tpu_custom_call.1} parent=1 // pred_check
      _
    $region63: #{tpu_custom_call.1} parent=1 // pred_check_branch
      %472 = sbr.rel (0) target = $region65
    $region64: #{tpu_custom_call.1} parent=1 // pred_region
      %474 = dma.done [#allocation4], 256
    $region65: #{tpu_custom_call.1} parent=1 // pred_fallthru
      _
    %475 = vsyncpa [#allocation3], 1
    %476 = vsyncpa [#allocation6], 1
    %477 = vsyncpa [#allocation9], 1
    %478 = vsyncpa [#allocation4], 1

// kernel: tpu_custom_call.1
$region0: #{tpu_custom_call.1}
  #allocation0 [shape = 'u32[]', space=smem, size = 0x4, offset = 0x4, fixed_abs, tag = 'smem constant byte address 0x4 - core index']
  #allocation1 [shape = 'u32[72,128]{1,0:T(1,128)}', space=vmem, size = 0x9000, scoped, tag = 'internal scratch']
  %s0 = inlined_call_operand.hbm [shape: bf16[16,128], index: 0, kind: input, shape index: {}]
  %s1 = inlined_call_operand.hbm [shape: bf16[128,128], index: 1, kind: input, shape index: {}]
  %s2 = inlined_call_operand.vmem [shape: f32[1,128], index: 2, kind: input, shape index: {}]
  %s3 = inlined_call_operand.hbm [shape: bf16[128,128], index: 3, kind: input, shape index: {}]
  %s4 = inlined_call_operand.vmem [shape: f32[1,128], index: 4, kind: input, shape index: {}]
  %s5 = inlined_call_operand.hbm [shape: bf16[128,128], index: 5, kind: input, shape index: {}]
  %s6 = inlined_call_operand.vmem [shape: f32[1,128], index: 6, kind: input, shape index: {}]
  %s7 = inlined_call_operand.hbm [shape: bf16[128,128], index: 7, kind: input, shape index: {}]
  %s8 = inlined_call_operand.vmem [shape: f32[1,128], index: 8, kind: input, shape index: {}]
  %s9 = inlined_call_operand.hbm [shape: f32[16,128], index: 9, kind: output, shape index: {}]
  %s10 = sld [smem:[#allocation0]]
  $region66: #{tpu_custom_call.1} parent=0
    _
  %s12 = ssub.s32 1, %s10
  %s13 = scalar_select 0, %s12, %s10
  $region1: #{tpu_custom_call.1} parent=0
    #allocation2 [shape = 'u8[4096]{0}', space=vmem, size = 0x1000, scoped, tag = 'input window, operand 0, single buffered']
    #allocation3 [shape = 's32[1]{0}', space=sflag, size = 0x4, scoped, tag = 'scoped memory for tpu_custom_call.1']
    #allocation4 [shape = 's32[1]{0}', space=sflag, size = 0x4, scoped, tag = 'scoped memory for tpu_custom_call.1']
    #allocation5 [shape = 'u8[32768]{0}', space=vmem, size = 0x8000, scoped, tag = 'input window, operand 1, single buffered']
    #allocation6 [shape = 's32[1]{0}', space=sflag, size = 0x4, scoped, tag = 'scoped memory for tpu_custom_call.1']
    #allocation7 [shape = 'u8[32768]{0}', space=vmem, size = 0x8000, scoped, tag = 'input window, operand 3, single buffered']
    #allocation8 [shape = 'u8[32768]{0}', space=vmem, size = 0x8000, scoped, tag = 'input window, operand 5, single buffered']
    #allocation9 [shape = 's32[1]{0}', space=sflag, size = 0x4, scoped, tag = 'scoped memory for tpu_custom_call.1']
    #allocation10 [shape = 'u8[32768]{0}', space=vmem, size = 0x8000, scoped, tag = 'input window, operand 7, single buffered']
    #allocation11 [shape = 'u8[8192]{0}', space=vmem, size = 0x2000, scoped, tag = 'output window, operand 0, single buffered']
    %14 = vsyncpa [#allocation3], 0
    %15 = vsyncpa [#allocation6], 0
    %16 = vsyncpa [#allocation9], 0
    %17 = vsyncpa [#allocation4], 0
    // Predicated region
    $region2: #{tpu_custom_call.1} parent=1 // pred_check
      _
    $region3: #{tpu_custom_call.1} parent=1 // pred_check_branch
      %19 = sbr.rel (0) target = $region5
    $region4: #{tpu_custom_call.1} parent=1 // pred_region
      %21 = vsyncadd [#allocation3], 0
      %s22 = sshll.u32 %s0, 4
      %s23 = int_to_ptr.hbm [resolvable:$true] %s22
      %s24 = sshll.u32 [#allocation2], 4
      %s25 = int_to_ptr.vmem [resolvable:$true] %s24
      %30 = dma.hbm_to_vmem [thread:$0]  %s23, 128, %s25, [#allocation3], 64, 64, 4
    $region5: #{tpu_custom_call.1} parent=1 // pred_fallthru
      _
    // Predicated region
    $region6: #{tpu_custom_call.1} parent=1 // pred_check
      _
    $region7: #{tpu_custom_call.1} parent=1 // pred_check_branch
      %32 = sbr.rel (0) target = $region9
    $region8: #{tpu_custom_call.1} parent=1 // pred_region
      %34 = vsyncadd [#allocation6], 0
      %s35 = sshll.u32 %s1, 4
      %s36 = int_to_ptr.hbm [resolvable:$true] %s35
      %s37 = sshll.u32 [#allocation5], 4
      %s38 = int_to_ptr.vmem [resolvable:$true] %s37
      %43 = dma.hbm_to_vmem [thread:$0]  %s36, 1024, %s38, [#allocation6], 64, 64, 4
    $region9: #{tpu_custom_call.1} parent=1 // pred_fallthru
      _
    // Predicated region
    $region10: #{tpu_custom_call.1} parent=1 // pred_check
      _
    $region11: #{tpu_custom_call.1} parent=1 // pred_check_branch
      %45 = sbr.rel (0) target = $region13
    $region12: #{tpu_custom_call.1} parent=1 // pred_region
      _
    $region13: #{tpu_custom_call.1} parent=1 // pred_fallthru
      _
    // Predicated region
    $region14: #{tpu_custom_call.1} parent=1 // pred_check
      _
    $region15: #{tpu_custom_call.1} parent=1 // pred_check_branch
      %47 = sbr.rel (0) target = $region17
    $region16: #{tpu_custom_call.1} parent=1 // pred_region
      %49 = vsyncadd [#allocation6], 0
      %s50 = sshll.u32 %s3, 4
      %s51 = int_to_ptr.hbm [resolvable:$true] %s50
      %s52 = sshll.u32 [#allocation7], 4
      %s53 = int_to_ptr.vmem [resolvable:$true] %s52
      %58 = dma.hbm_to_vmem [thread:$0]  %s51, 1024, %s53, [#allocation6], 64, 64, 4
    $region17: #{tpu_custom_call.1} parent=1 // pred_fallthru
      _
    // Predicated region
    $region18: #{tpu_custom_call.1} parent=1 // pred_check
      _
    $region19: #{tpu_custom_call.1} parent=1 // pred_check_branch
      %60 = sbr.rel (0) target = $region21
    $region20: #{tpu_custom_call.1} parent=1 // pred_region
      _
    $region21: #{tpu_custom_call.1} parent=1 // pred_fallthru
      _
    // Predicated region
    $region22: #{tpu_custom_call.1} parent=1 // pred_check
      _
    $region23: #{tpu_custom_call.1} parent=1 // pred_check_branch
      %62 = sbr.rel (0) target = $region25
    $region24: #{tpu_custom_call.1} parent=1 // pred_region
      %64 = vsyncadd [#allocation9], 0
      %s65 = sshll.u32 %s5, 4
      %s66 = int_to_ptr.hbm [resolvable:$true] %s65
      %s67 = sshll.u32 [#allocation8], 4
      %s68 = int_to_ptr.vmem [resolvable:$true] %s67
      %73 = dma.hbm_to_vmem [thread:$0]  %s66, 1024, %s68, [#allocation9], 64, 64, 4
    $region25: #{tpu_custom_call.1} parent=1 // pred_fallthru
      _
    // Predicated region
    $region26: #{tpu_custom_call.1} parent=1 // pred_check
      _
    $region27: #{tpu_custom_call.1} parent=1 // pred_check_branch
      %75 = sbr.rel (0) target = $region29
    $region28: #{tpu_custom_call.1} parent=1 // pred_region
      _
    $region29: #{tpu_custom_call.1} parent=1 // pred_fallthru
      _
    // Predicated region
    $region30: #{tpu_custom_call.1} parent=1 // pred_check
      _
    $region31: #{tpu_custom_call.1} parent=1 // pred_check_branch
      %77 = sbr.rel (0) target = $region33
    $region32: #{tpu_custom_call.1} parent=1 // pred_region
      %79 = vsyncadd [#allocation9], 0
      %s80 = sshll.u32 %s7, 4
      %s81 = int_to_ptr.hbm [resolvable:$true] %s80
      %s82 = sshll.u32 [#allocation10], 4
      %s83 = int_to_ptr.vmem [resolvable:$true] %s82
      %88 = dma.hbm_to_vmem [thread:$0]  %s81, 1024, %s83, [#allocation9], 64, 64, 4
    $region33: #{tpu_custom_call.1} parent=1 // pred_fallthru
      _
    // Predicated region
    $region34: #{tpu_custom_call.1} parent=1 // pred_check
      _
    $region35: #{tpu_custom_call.1} parent=1 // pred_check_branch
      %90 = sbr.rel (0) target = $region37
    $region36: #{tpu_custom_call.1} parent=1 // pred_region
      _
    $region37: #{tpu_custom_call.1} parent=1 // pred_fallthru
      _
    // Predicated region
    $region38: #{tpu_custom_call.1} parent=1 // pred_check
      _
    $region39: #{tpu_custom_call.1} parent=1 // pred_check_branch
      %92 = sbr.rel (0) target = $region41
    $region40: #{tpu_custom_call.1} parent=1 // pred_region
      %94 = dma.done [#allocation3], 128
    $region41: #{tpu_custom_call.1} parent=1 // pred_fallthru
      _
    // Predicated region
    $region42: #{tpu_custom_call.1} parent=1 // pred_check
      _
    $region43: #{tpu_custom_call.1} parent=1 // pred_check_branch
      %96 = sbr.rel (0) target = $region45
    $region44: #{tpu_custom_call.1} parent=1 // pred_region
      %98 = dma.done [#allocation6], 1024
    $region45: #{tpu_custom_call.1} parent=1 // pred_fallthru
      _
    // Predicated region
    $region46: #{tpu_custom_call.1} parent=1 // pred_check
      _
    $region47: #{tpu_custom_call.1} parent=1 // pred_check_branch
      %100 = sbr.rel (0) target = $region49
    $region48: #{tpu_custom_call.1} parent=1 // pred_region
      %102 = dma.done [#allocation6], 1024
    $region49: #{tpu_custom_call.1} parent=1 // pred_fallthru
      _
    // Predicated region
    $region50: #{tpu_custom_call.1} parent=1 // pred_check
      _
    $region51: #{tpu_custom_call.1} parent=1 // pred_check_branch
      %104 = sbr.rel (0) target = $region53
    $region52: #{tpu_custom_call.1} parent=1 // pred_region
      %106 = dma.done [#allocation9], 1024
    $region53: #{tpu_custom_call.1} parent=1 // pred_fallthru
      _
    // Predicated region
    $region54: #{tpu_custom_call.1} parent=1 // pred_check
      _
    $region55: #{tpu_custom_call.1} parent=1 // pred_check_branch
      %108 = sbr.rel (0) target = $region57
    $region56: #{tpu_custom_call.1} parent=1 // pred_region
      %110 = dma.done [#allocation9], 1024
    $region57: #{tpu_custom_call.1} parent=1 // pred_fallthru
      _
    %v111 = vld [vmem:[#allocation2] sm:$0xf]
    %v112 = vld [vmem:[#allocation2 + $0x4] sm:$0xf]
    %v113 = vld [vmem:[#allocation5] sm:$0xf]
    %v114 = vld [vmem:[#allocation5 + $0x4] sm:$0xf]
    %v115 = vld [vmem:[#allocation5 + $0x8] sm:$0xf]
    %v116 = vld [vmem:[#allocation5 + $0xc] sm:$0xf]
    %v117 = vld [vmem:[#allocation5 + $0x10] sm:$0xf]
    %v118 = vld [vmem:[#allocation5 + $0x14] sm:$0xf]
    %v119 = vld [vmem:[#allocation5 + $0x18] sm:$0xf]
    %v120 = vld [vmem:[#allocation5 + $0x1c] sm:$0xf]
    %v121 = vld [vmem:[#allocation5 + $0x20] sm:$0xf]
    %v122 = vld [vmem:[#allocation5 + $0x24] sm:$0xf]
    %v123 = vld [vmem:[#allocation5 + $0x28] sm:$0xf]
    %v124 = vld [vmem:[#allocation5 + $0x2c] sm:$0xf]
    %v125 = vld [vmem:[#allocation5 + $0x30] sm:$0xf]
    %v126 = vld [vmem:[#allocation5 + $0x34] sm:$0xf]
    %v127 = vld [vmem:[#allocation5 + $0x38] sm:$0xf]
    %v128 = vld [vmem:[#allocation5 + $0x3c] sm:$0xf]
    %v129 = vld [vmem:[%s2] sm:$0x1]
    %v131 = vperm.slane %v129, 0
    %v135 = vunpack.c.l.b16 %v111
    %v136 = vunpack.c.l.b16 %v112
    %v137 = vpack.c.b16 %v136, %v135
    %v155 = vunpack.c.l.b16 %v113
    %v156 = vunpack.c.l.b16 %v114
    %v157 = vunpack.c.l.b16 %v115
    %v158 = vunpack.c.l.b16 %v116
    %v159 = vunpack.c.l.b16 %v117
    %v160 = vunpack.c.l.b16 %v118
    %v161 = vunpack.c.l.b16 %v119
    %v162 = vunpack.c.l.b16 %v120
    %v163 = vunpack.c.l.b16 %v121
    %v164 = vunpack.c.l.b16 %v122
    %v165 = vunpack.c.l.b16 %v123
    %v166 = vunpack.c.l.b16 %v124
    %v167 = vunpack.c.l.b16 %v125
    %v168 = vunpack.c.l.b16 %v126
    %v169 = vunpack.c.l.b16 %v127
    %v170 = vunpack.c.l.b16 %v128
    %v171 = vpack.c.b16 %v156, %v155
    %v172 = vpack.c.b16 %v158, %v157
    %v173 = vpack.c.b16 %v160, %v159
    %v174 = vpack.c.b16 %v162, %v161
    %v175 = vpack.c.b16 %v164, %v163
    %v176 = vpack.c.b16 %v166, %v165
    %v177 = vpack.c.b16 %v168, %v167
    %v178 = vpack.c.b16 %v170, %v169
    %187 = vmatpush.bf16.msra.mxu0 %v178
    %188 = vmatpush.bf16.msra.mxu0 %v177
    %189 = vmatpush.bf16.msra.mxu0 %v176
    %190 = vmatpush.bf16.msra.mxu0 %v175
    %191 = vmatpush.bf16.msra.mxu0 %v174
    %192 = vmatpush.bf16.msra.mxu0 %v173
    %193 = vmatpush.bf16.msra.mxu0 %v172
    %194 = vmatpush.bf16.msra.mxu0 %v171
    %195 = vmatmul.bf16.gmra.mxu0 %v137
    %v196 = vpop.f32.mrf.mxu0
    %v197 = vadd.f32 %v131, %v196
    %v198 = vpop.f32.mrf.mxu0
    %v199 = vadd.f32 %v131, %v198
    %200 = vdwg.mxu0
    %v201 = vmax.f32 %v197, 0.0
    %v202 = vmax.f32 %v199, 0.0
    %v203 = vpack.c.bf16 %v202, %v201
    %v204 = vld [vmem:[#allocation7] sm:$0xf]
    %v205 = vld [vmem:[#allocation7 + $0x4] sm:$0xf]
    %v206 = vld [vmem:[#allocation7 + $0x8] sm:$0xf]
    %v207 = vld [vmem:[#allocation7 + $0xc] sm:$0xf]
    %v208 = vld [vmem:[#allocation7 + $0x10] sm:$0xf]
    %v209 = vld [vmem:[#allocation7 + $0x14] sm:$0xf]
    %v210 = vld [vmem:[#allocation7 + $0x18] sm:$0xf]
    %v211 = vld [vmem:[#allocation7 + $0x1c] sm:$0xf]
    %v212 = vld [vmem:[#allocation7 + $0x20] sm:$0xf]
    %v213 = vld [vmem:[#allocation7 + $0x24] sm:$0xf]
    %v214 = vld [vmem:[#allocation7 + $0x28] sm:$0xf]
    %v215 = vld [vmem:[#allocation7 + $0x2c] sm:$0xf]
    %v216 = vld [vmem:[#allocation7 + $0x30] sm:$0xf]
    %v217 = vld [vmem:[#allocation7 + $0x34] sm:$0xf]
    %v218 = vld [vmem:[#allocation7 + $0x38] sm:$0xf]
    %v219 = vld [vmem:[#allocation7 + $0x3c] sm:$0xf]
    %v220 = vld [vmem:[%s4] sm:$0x1]
    %v222 = vperm.slane %v220, 0
    %v240 = vunpack.c.l.b16 %v204
    %v241 = vunpack.c.l.b16 %v205
    %v242 = vunpack.c.l.b16 %v206
    %v243 = vunpack.c.l.b16 %v207
    %v244 = vunpack.c.l.b16 %v208
    %v245 = vunpack.c.l.b16 %v209
    %v246 = vunpack.c.l.b16 %v210
    %v247 = vunpack.c.l.b16 %v211
    %v248 = vunpack.c.l.b16 %v212
    %v249 = vunpack.c.l.b16 %v213
    %v250 = vunpack.c.l.b16 %v214
    %v251 = vunpack.c.l.b16 %v215
    %v252 = vunpack.c.l.b16 %v216
    %v253 = vunpack.c.l.b16 %v217
    %v254 = vunpack.c.l.b16 %v218
    %v255 = vunpack.c.l.b16 %v219
    %v256 = vpack.c.b16 %v241, %v240
    %v257 = vpack.c.b16 %v243, %v242
    %v258 = vpack.c.b16 %v245, %v244
    %v259 = vpack.c.b16 %v247, %v246
    %v260 = vpack.c.b16 %v249, %v248
    %v261 = vpack.c.b16 %v251, %v250
    %v262 = vpack.c.b16 %v253, %v252
    %v263 = vpack.c.b16 %v255, %v254
    %272 = vmatpush.bf16.msra.mxu0 %v263
    %273 = vmatpush.bf16.msra.mxu0 %v262
    %274 = vmatpush.bf16.msra.mxu0 %v261
    %275 = vmatpush.bf16.msra.mxu0 %v260
    %276 = vmatpush.bf16.msra.mxu0 %v259
    %277 = vmatpush.bf16.msra.mxu0 %v258
    %278 = vmatpush.bf16.msra.mxu0 %v257
    %279 = vmatpush.bf16.msra.mxu0 %v256
    %280 = vmatmul.bf16.gmra.mxu0 %v203
    %v281 = vpop.f32.mrf.mxu0
    %v282 = vadd.f32 %v222, %v281
    %v283 = vpop.f32.mrf.mxu0
    %v284 = vadd.f32 %v222, %v283
    %285 = vdwg.mxu0
    %v286 = vmax.f32 %v282, 0.0
    %v287 = vmax.f32 %v284, 0.0
    %v288 = vpack.c.bf16 %v287, %v286
    %v289 = vld [vmem:[#allocation8] sm:$0xf]
    %v290 = vld [vmem:[#allocation8 + $0x4] sm:$0xf]
    %v291 = vld [vmem:[#allocation8 + $0x8] sm:$0xf]
    %v292 = vld [vmem:[#allocation8 + $0xc] sm:$0xf]
    %v293 = vld [vmem:[#allocation8 + $0x10] sm:$0xf]
    %v294 = vld [vmem:[#allocation8 + $0x14] sm:$0xf]
    %v295 = vld [vmem:[#allocation8 + $0x18] sm:$0xf]
    %v296 = vld [vmem:[#allocation8 + $0x1c] sm:$0xf]
    %v297 = vld [vmem:[#allocation8 + $0x20] sm:$0xf]
    %v298 = vld [vmem:[#allocation8 + $0x24] sm:$0xf]
    %v299 = vld [vmem:[#allocation8 + $0x28] sm:$0xf]
    %v300 = vld [vmem:[#allocation8 + $0x2c] sm:$0xf]
    %v301 = vld [vmem:[#allocation8 + $0x30] sm:$0xf]
    %v302 = vld [vmem:[#allocation8 + $0x34] sm:$0xf]
    %v303 = vld [vmem:[#allocation8 + $0x38] sm:$0xf]
    %v304 = vld [vmem:[#allocation8 + $0x3c] sm:$0xf]
    %v305 = vld [vmem:[%s6] sm:$0x1]
    %v307 = vperm.slane %v305, 0
    %v325 = vunpack.c.l.b16 %v289
    %v326 = vunpack.c.l.b16 %v290
    %v327 = vunpack.c.l.b16 %v291
    %v328 = vunpack.c.l.b16 %v292
    %v329 = vunpack.c.l.b16 %v293
    %v330 = vunpack.c.l.b16 %v294
    %v331 = vunpack.c.l.b16 %v295
    %v332 = vunpack.c.l.b16 %v296
    %v333 = vunpack.c.l.b16 %v297
    %v334 = vunpack.c.l.b16 %v298
    %v335 = vunpack.c.l.b16 %v299
    %v336 = vunpack.c.l.b16 %v300
    %v337 = vunpack.c.l.b16 %v301
    %v338 = vunpack.c.l.b16 %v302
    %v339 = vunpack.c.l.b16 %v303
    %v340 = vunpack.c.l.b16 %v304
    %v341 = vpack.c.b16 %v326, %v325
    %v342 = vpack.c.b16 %v328, %v327
    %v343 = vpack.c.b16 %v330, %v329
    %v344 = vpack.c.b16 %v332, %v331
    %v345 = vpack.c.b16 %v334, %v333
    %v346 = vpack.c.b16 %v336, %v335
    %v347 = vpack.c.b16 %v338, %v337
    %v348 = vpack.c.b16 %v340, %v339
    %357 = vmatpush.bf16.msra.mxu0 %v348
    %358 = vmatpush.bf16.msra.mxu0 %v347
    %359 = vmatpush.bf16.msra.mxu0 %v346
    %360 = vmatpush.bf16.msra.mxu0 %v345
    %361 = vmatpush.bf16.msra.mxu0 %v344
    %362 = vmatpush.bf16.msra.mxu0 %v343
    %363 = vmatpush.bf16.msra.mxu0 %v342
    %364 = vmatpush.bf16.msra.mxu0 %v341
    %365 = vmatmul.bf16.gmra.mxu0 %v288
    %v366 = vpop.f32.mrf.mxu0
    %v367 = vadd.f32 %v307, %v366
    %v368 = vpop.f32.mrf.mxu0
    %v369 = vadd.f32 %v307, %v368
    %370 = vdwg.mxu0
    %v371 = vmax.f32 %v367, 0.0
    %v372 = vmax.f32 %v369, 0.0
    %v373 = vpack.c.bf16 %v372, %v371
    %v374 = vld [vmem:[#allocation10] sm:$0xf]
    %v375 = vld [vmem:[#allocation10 + $0x4] sm:$0xf]
    %v376 = vld [vmem:[#allocation10 + $0x8] sm:$0xf]
    %v377 = vld [vmem:[#allocation10 + $0xc] sm:$0xf]
    %v378 = vld [vmem:[#allocation10 + $0x10] sm:$0xf]
    %v379 = vld [vmem:[#allocation10 + $0x14] sm:$0xf]
    %v380 = vld [vmem:[#allocation10 + $0x18] sm:$0xf]
    %v381 = vld [vmem:[#allocation10 + $0x1c] sm:$0xf]
    %v382 = vld [vmem:[#allocation10 + $0x20] sm:$0xf]
    %v383 = vld [vmem:[#allocation10 + $0x24] sm:$0xf]
    %v384 = vld [vmem:[#allocation10 + $0x28] sm:$0xf]
    %v385 = vld [vmem:[#allocation10 + $0x2c] sm:$0xf]
    %v386 = vld [vmem:[#allocation10 + $0x30] sm:$0xf]
    %v387 = vld [vmem:[#allocation10 + $0x34] sm:$0xf]
    %v388 = vld [vmem:[#allocation10 + $0x38] sm:$0xf]
    %v389 = vld [vmem:[#allocation10 + $0x3c] sm:$0xf]
    %v390 = vld [vmem:[%s8] sm:$0x1]
    %v392 = vperm.slane %v390, 0
    %v410 = vunpack.c.l.b16 %v374
    %v411 = vunpack.c.l.b16 %v375
    %v412 = vunpack.c.l.b16 %v376
    %v413 = vunpack.c.l.b16 %v377
    %v414 = vunpack.c.l.b16 %v378
    %v415 = vunpack.c.l.b16 %v379
    %v416 = vunpack.c.l.b16 %v380
    %v417 = vunpack.c.l.b16 %v381
    %v418 = vunpack.c.l.b16 %v382
    %v419 = vunpack.c.l.b16 %v383
    %v420 = vunpack.c.l.b16 %v384
    %v421 = vunpack.c.l.b16 %v385
    %v422 = vunpack.c.l.b16 %v386
    %v423 = vunpack.c.l.b16 %v387
    %v424 = vunpack.c.l.b16 %v388
    %v425 = vunpack.c.l.b16 %v389
    %v426 = vpack.c.b16 %v411, %v410
    %v427 = vpack.c.b16 %v413, %v412
    %v428 = vpack.c.b16 %v415, %v414
    %v429 = vpack.c.b16 %v417, %v416
    %v430 = vpack.c.b16 %v419, %v418
    %v431 = vpack.c.b16 %v421, %v420
    %v432 = vpack.c.b16 %v423, %v422
    %v433 = vpack.c.b16 %v425, %v424
    %442 = vmatpush.bf16.msra.mxu0 %v433
    %443 = vmatpush.bf16.msra.mxu0 %v432
    %444 = vmatpush.bf16.msra.mxu0 %v431
    %445 = vmatpush.bf16.msra.mxu0 %v430
    %446 = vmatpush.bf16.msra.mxu0 %v429
    %447 = vmatpush.bf16.msra.mxu0 %v428
    %448 = vmatpush.bf16.msra.mxu0 %v427
    %449 = vmatpush.bf16.msra.mxu0 %v426
    %450 = vmatmul.bf16.gmra.mxu0 %v373
    %v451 = vpop.f32.mrf.mxu0
    %v452 = vadd.f32 %v392, %v451
    %v453 = vpop.f32.mrf.mxu0
    %v454 = vadd.f32 %v392, %v453
    %455 = vdwg.mxu0
    %456 = vst [vmem:[#allocation11] sm:$0xff] %v452
    %457 = vst [vmem:[#allocation11 + $0x8] sm:$0xff] %v454
    // Predicated region
    $region58: #{tpu_custom_call.1} parent=1 // pred_check
      _
    $region59: #{tpu_custom_call.1} parent=1 // pred_check_branch
      %459 = sbr.rel (0) target = $region61
    $region60: #{tpu_custom_call.1} parent=1 // pred_region
      %461 = vsyncadd [#allocation4], 0
      %s462 = sshll.u32 [#allocation11], 4
      %s463 = int_to_ptr.vmem [resolvable:$true] %s462
      %s464 = sshll.u32 %s9, 4
      %s465 = int_to_ptr.hbm [resolvable:$true] %s464
      %470 = dma.vmem_to_hbm [thread:$0]  %s463, 256, %s465, [#allocation4], 128, 128, 8
    $region61: #{tpu_custom_call.1} parent=1 // pred_fallthru
      _
    // Predicated region
    $region62: #{tpu_custom_call.1} parent=1 // pred_check
      _
    $region63: #{tpu_custom_call.1} parent=1 // pred_check_branch
      %472 = sbr.rel (0) target = $region65
    $region64: #{tpu_custom_call.1} parent=1 // pred_region
      %474 = dma.done [#allocation4], 256
    $region65: #{tpu_custom_call.1} parent=1 // pred_fallthru
      _
    %475 = vsyncpa [#allocation3], 1
    %476 = vsyncpa [#allocation6], 1
    %477 = vsyncpa [#allocation9], 1
    %478 = vsyncpa [#allocation4], 1

</llo_original>
